<compile_context>
chip_gen: v6e
topology: v6e:2x2x1
jax: 0.10.0
libtpu: 0.0.40
codegen_flags: <defaults>
</compile_context>

<pallas_src>
import math

import jax
import jax.numpy as jnp
from jax import lax
from jax.experimental import pallas as pl
from jax.experimental.pallas import tpu as pltpu


# x:(B, In) . w:(Out, In), contracting on In of both operands (== F.linear).
_CONTRACT_IN = (((1,), (1,)), ((), ()))


# ----------------------------- kernels ------------------------------------ #

def _noisy_kernel_acc(x_ref, wmu_ref, wsig_ref, ein_ref, eout_ref, bias_ref,
                      o_ref, accmu_ref, accsig_ref):
    """Training path, K tiled: reassociated noise, two MXU matmuls / step."""
    k = pl.program_id(2)

    @pl.when(k == 0)
    def _():
        accmu_ref[...] = jnp.zeros_like(accmu_ref)
        accsig_ref[...] = jnp.zeros_like(accsig_ref)

    x = x_ref[...]
    xw = x.astype(wmu_ref.dtype)
    accmu_ref[...] += lax.dot_general(
        xw, wmu_ref[...], _CONTRACT_IN, preferred_element_type=jnp.float32)

    # (x * eps_in) @ wsig.T  — tiny (tb, tk) VPU scale instead of rebuilding a
    # (to, tk) noisy weight; eps_out scaling happens once at finalize.
    xs = (x * ein_ref[...]).astype(wsig_ref.dtype)
    accsig_ref[...] += lax.dot_general(
        xs, wsig_ref[...], _CONTRACT_IN, preferred_element_type=jnp.float32)

    @pl.when(k == pl.num_programs(2) - 1)
    def _():
        o_ref[...] = (accmu_ref[...] + accsig_ref[...] * eout_ref[...]
                      + bias_ref[...]).astype(o_ref.dtype)


def _noisy_kernel_1k(x_ref, wmu_ref, wsig_ref, ein_ref, eout_ref, bias_ref,
                     o_ref):
    """Training path, single K step: no accumulator / init / RMW passes."""
    x = x_ref[...]
    xw = x.astype(wmu_ref.dtype)
    mu = lax.dot_general(xw, wmu_ref[...], _CONTRACT_IN,
                         preferred_element_type=jnp.float32)
    xs = (x * ein_ref[...]).astype(wsig_ref.dtype)
    sig = lax.dot_general(xs, wsig_ref[...], _CONTRACT_IN,
                          preferred_element_type=jnp.float32)
    o_ref[...] = (mu + sig * eout_ref[...] + bias_ref[...]).astype(o_ref.dtype)


def _mu_kernel_acc(x_ref, wmu_ref, bias_ref, o_ref, acc_ref):
    """Eval path (weight = weight_mu, bias = bias_mu), K tiled."""
    k = pl.program_id(2)

    @pl.when(k == 0)
    def _():
        acc_ref[...] = jnp.zeros_like(acc_ref)

    acc_ref[...] += lax.dot_general(
        x_ref[...].astype(wmu_ref.dtype), wmu_ref[...], _CONTRACT_IN,
        preferred_element_type=jnp.float32)

    @pl.when(k == pl.num_programs(2) - 1)
    def _():
        o_ref[...] = (acc_ref[...] + bias_ref[...]).astype(o_ref.dtype)


def _mu_kernel_1k(x_ref, wmu_ref, bias_ref, o_ref):
    acc = lax.dot_general(
        x_ref[...].astype(wmu_ref.dtype), wmu_ref[...], _CONTRACT_IN,
        preferred_element_type=jnp.float32)
    o_ref[...] = (acc + bias_ref[...]).astype(o_ref.dtype)


# ----------------------------- wrapper ------------------------------------ #

# Tile caps: tb covers whole padded batch for typical RL sizes (weights
# stream once); to/tk budgeted well inside v7x's 64 MiB VMEM even with
# double-buffered wmu/wsig streams.
_TB_CAP, _TO_CAP, _TK_CAP = 512, 256, 512


def _round_up(x, m):
    return (x + m - 1) // m * m


def _pick_tile(dim, cap, quantum):
    """Largest multiple of `quantum` dividing `dim`, capped at `cap`."""
    t = max((min(dim, cap) // quantum) * quantum, quantum)
    while dim % t:
        t -= quantum
    return t


def _plan(dim, cap, quantum):
    """(padded_dim, tile, n_tiles).  Whole-dim block (no padding) if it fits."""
    if dim <= cap:
        return dim, dim, 1
    pad = _round_up(dim, quantum)
    tile = _pick_tile(pad, cap, quantum)
    return pad, tile, pad // tile


def _pad2(a, rows, cols):
    pr, pc = rows - a.shape[0], cols - a.shape[1]
    if pr == 0 and pc == 0:
        return a  # no wrapper-side HBM pass
    return jnp.pad(a, ((0, pr), (0, pc)))


def noisy_linear(x, weight_mu, weight_sigma, eps_in, eps_out,
                 bias_mu, bias_sigma, bias_epsilon, training=True):
    """Forward of NoisyLinear.

    eps_in (In,) / eps_out (Out,) are the factored noise vectors;
    weight_epsilon = outer(eps_out, eps_in) is never materialized.
    weight_mu / weight_sigma may be stored in bf16 to halve weight HBM
    traffic; the MXU still accumulates in f32.
    """
    B, In = x.shape
    Out = weight_mu.shape[0]

    B_pad, tb, gb = _plan(B, _TB_CAP, 8)
    In_pad, tk, gk = _plan(In, _TK_CAP, 128)
    Out_pad, to, go = _plan(Out, _TO_CAP, 128)

    # v7x megacore: guarantee >= 2 steps on a "parallel" axis when it costs
    # nothing (Out multiple of 128, weights still streamed once since gb==1).
    if gb == 1 and go == 1 and Out >= 256 and Out % 128 == 0:
        to = _pick_tile(Out, max(Out // 2, 128), 128)
        go = Out // to

    # TODO(synk): if gb > 1 (batch > _TB_CAP), weight tiles are re-streamed
    # per batch tile; a weight-resident restructuring would avoid that.

    x_p = _pad2(x, B_pad, In_pad)
    wmu_p = _pad2(weight_mu, Out_pad, In_pad)

    if training:
        bias = (bias_mu + bias_sigma * bias_epsilon).reshape(1, Out)
    else:
        bias = bias_mu.reshape(1, Out)
    bias_p = _pad2(bias, 1, Out_pad)

    x_spec = pl.BlockSpec((tb, tk), lambda i, j, k: (i, k))
    w_spec = pl.BlockSpec((to, tk), lambda i, j, k: (j, k))
    rowo_spec = pl.BlockSpec((1, to), lambda i, j, k: (0, j))   # bias / eps_out
    rowi_spec = pl.BlockSpec((1, tk), lambda i, j, k: (0, k))   # eps_in
    out_spec = pl.BlockSpec((tb, to), lambda i, j, k: (i, j))

    if training:
        wsig_p = _pad2(weight_sigma, Out_pad, In_pad)
        ein_p = _pad2(eps_in.reshape(1, In), 1, In_pad)
        eout_p = _pad2(eps_out.reshape(1, Out), 1, Out_pad)

        kernel = _noisy_kernel_acc if gk > 1 else _noisy_kernel_1k
        scratch = ([pltpu.VMEM((tb, to), jnp.float32),
                    pltpu.VMEM((tb, to), jnp.float32)] if gk > 1 else [])
        in_specs = [x_spec, w_spec, w_spec, rowi_spec, rowo_spec, rowo_spec]
        operands = (x_p, wmu_p, wsig_p, ein_p, eout_p, bias_p)
        n_w = 2
    else:
        kernel = _mu_kernel_acc if gk > 1 else _mu_kernel_1k
        scratch = [pltpu.VMEM((tb, to), jnp.float32)] if gk > 1 else []
        in_specs = [x_spec, w_spec, rowo_spec]
        operands = (x_p, wmu_p, bias_p)
        n_w = 1

    wbytes = jnp.dtype(weight_mu.dtype).itemsize
    xbytes = jnp.dtype(x.dtype).itemsize
    cost = pl.CostEstimate(
        flops=2 * B_pad * In_pad * Out_pad * n_w,
        transcendentals=0,
        bytes_accessed=(xbytes * B_pad * In_pad * go            # x per out tile
                        + wbytes * Out_pad * In_pad * n_w * gb  # weights / batch tile
                        + 4 * (In_pad + 2 * Out_pad)            # noise + bias rows
                        + 4 * B_pad * Out_pad))                 # output

    out_p = pl.pallas_call(
        kernel,
        out_shape=jax.ShapeDtypeStruct((B_pad, Out_pad), x.dtype),
        grid_spec=pltpu.PrefetchScalarGridSpec(
            num_scalar_prefetch=0,
            grid=(gb, go, gk),
            in_specs=in_specs,
            out_specs=out_spec,
            scratch_shapes=scratch),
        compiler_params=pltpu.CompilerParams(
            dimension_semantics=("parallel", "parallel", "arbitrary"),
            vmem_limit_bytes=32 * 1024 * 1024),
        cost_estimate=cost,
    )(*operands)

    if B_pad != B or Out_pad != Out:
        out_p = out_p[:B, :Out]
    return out_p


# ----------------------- param init (plain JAX) ---------------------------- #

def _scale_noise(key, size):
    # torch: x = randn(size); x.sign() * x.abs().sqrt()
    x = jax.random.normal(key, (size,), dtype=jnp.float32)
    return jnp.sign(x) * jnp.sqrt(jnp.abs(x))


def init_noisy_linear_params(key, in_features, out_features, std_init=0.4):
    k_wmu, k_bmu, k_ein, k_eout, k_beps = jax.random.split(key, 5)
    mu_range = 1.0 / math.sqrt(in_features)

    weight_mu = jax.random.uniform(
        k_wmu, (out_features, in_features), jnp.float32,
        minval=-mu_range, maxval=mu_range)
    weight_sigma = jnp.full((out_features, in_features),
                            std_init / math.sqrt(in_features), jnp.float32)
    bias_mu = jax.random.uniform(
        k_bmu, (out_features,), jnp.float32, minval=-mu_range, maxval=mu_range)
    bias_sigma = jnp.full((out_features,),
                          std_init / math.sqrt(out_features), jnp.float32)

    # Factored noise vectors (weight_epsilon = outer(eps_out, eps_in) is
    # reassociated into the matmul inside the kernel, never materialized).
    eps_in = _scale_noise(k_ein, in_features)
    eps_out = _scale_noise(k_eout, out_features)
    bias_epsilon = _scale_noise(k_beps, out_features)

    return dict(weight_mu=weight_mu, weight_sigma=weight_sigma,
                eps_in=eps_in, eps_out=eps_out, bias_mu=bias_mu,
                bias_sigma=bias_sigma, bias_epsilon=bias_epsilon)


# --------------------------------- main ------------------------------------ #

if __name__ == "__main__":
    key = jax.random.PRNGKey(0)
    k_params, k_x = jax.random.split(key)

    batch, in_features, out_features = 8, 32, 64
    params = init_noisy_linear_params(k_params, in_features, out_features)
    x = jax.random.normal(k_x, (batch, in_features), dtype=jnp.float32)

    # training=True path (noisy weights), f32 streams
    out_train = noisy_linear(
        x, params["weight_mu"], params["weight_sigma"],
        params["eps_in"], params["eps_out"],
        params["bias_mu"], params["bias_sigma"], params["bias_epsilon"],
        training=True)
    out_train = jax.block_until_ready(out_train)

    # training=False path (mu only)
    out_eval = noisy_linear(
        x, params["weight_mu"], params["weight_sigma"],
        params["eps_in"], params["eps_out"],
        params["bias_mu"], params["bias_sigma"], params["bias_epsilon"],
        training=False)
    out_eval = jax.block_until_ready(out_eval)

    # training=True with bf16-stored weights (halved weight HBM traffic,
    # f32 MXU accumulation) — looser tolerance by construction.
    out_bf16 = noisy_linear(
        x, params["weight_mu"].astype(jnp.bfloat16),
        params["weight_sigma"].astype(jnp.bfloat16),
        params["eps_in"], params["eps_out"],
        params["bias_mu"], params["bias_sigma"], params["bias_epsilon"],
        training=True)
    out_bf16 = jax.block_until_ready(out_bf16)

    # plain-JAX reference checks
    weight_eps = jnp.outer(params["eps_out"], params["eps_in"])
    w_train = params["weight_mu"] + params["weight_sigma"] * weight_eps
    b_train = params["bias_mu"] + params["bias_sigma"] * params["bias_epsilon"]
    ref_train = x @ w_train.T + b_train
    ref_eval = x @ params["weight_mu"].T + params["bias_mu"]

    assert jnp.allclose(out_train, ref_train, atol=1e-5, rtol=1e-5), \
        "training-path mismatch vs reference"
    assert jnp.allclose(out_eval, ref_eval, atol=1e-5, rtol=1e-5), \
        "eval-path mismatch vs reference"
    assert jnp.allclose(out_bf16, ref_train, atol=1e-1, rtol=1e-1), \
        "bf16-weight training-path mismatch vs reference"

    print("KERNEL_OK")
</pallas_src>

<mosaic_0001>
module attributes {stable_mosaic.version = 11 : i64} {
  func.func @_noisy_kernel_1k(%arg0: i32, %arg1: i32, %arg2: i32, %arg3: memref<8x32xf32, #tpu.memory_space<vmem>>, %arg4: memref<64x32xf32, #tpu.memory_space<vmem>>, %arg5: memref<64x32xf32, #tpu.memory_space<vmem>>, %arg6: memref<1x32xf32, #tpu.memory_space<vmem>>, %arg7: memref<1x64xf32, #tpu.memory_space<vmem>>, %arg8: memref<1x64xf32, #tpu.memory_space<vmem>>, %arg9: memref<8x64xf32, #tpu.memory_space<vmem>>) attributes {dimension_semantics = [#tpu.dimension_semantics<parallel>, #tpu.dimension_semantics<parallel>, #tpu.dimension_semantics<arbitrary>], iteration_bounds = array<i64: 1, 1, 1>, scalar_prefetch = 0 : i64, scratch_operands = 0 : i64, tpu.core_type = #tpu.core_type<tc>, window_params = [{transform_indices = @transform_0, window_bounds = array<i64: 8, 32>}, {transform_indices = @transform_1, window_bounds = array<i64: 64, 32>}, {transform_indices = @transform_2, window_bounds = array<i64: 64, 32>}, {transform_indices = @transform_3, window_bounds = array<i64: 1, 32>}, {transform_indices = @transform_4, window_bounds = array<i64: 1, 64>}, {transform_indices = @transform_5, window_bounds = array<i64: 1, 64>}, {transform_indices = @transform_6, window_bounds = array<i64: 8, 64>}]} {
    %c0 = arith.constant 0 : index
    %c0_0 = arith.constant 0 : index
    %0 = vector.load %arg3[%c0, %c0_0] : memref<8x32xf32, #tpu.memory_space<vmem>>, vector<8x32xf32>
    %c0_1 = arith.constant 0 : index
    %c0_2 = arith.constant 0 : index
    %1 = vector.load %arg4[%c0_1, %c0_2] : memref<64x32xf32, #tpu.memory_space<vmem>>, vector<64x32xf32>
    %cst = arith.constant dense<0.000000e+00> : vector<8x64xf32>
    %2 = tpu.matmul %0, %1, %cst {dimension_numbers = #tpu.dot_dimension_numbers<[1], [1], [0], [0], [0, 0, 1, 0], [], []>} : vector<8x32xf32>, vector<64x32xf32>, vector<8x64xf32> -> vector<8x64xf32>
    %c0_3 = arith.constant 0 : index
    %c0_4 = arith.constant 0 : index
    %3 = vector.load %arg6[%c0_3, %c0_4] : memref<1x32xf32, #tpu.memory_space<vmem>>, vector<1x32xf32>
    %4 = vector.broadcast %3 : vector<1x32xf32> to vector<8x32xf32>
    %5 = arith.mulf %0, %4 : vector<8x32xf32>
    %c0_5 = arith.constant 0 : index
    %c0_6 = arith.constant 0 : index
    %6 = vector.load %arg5[%c0_5, %c0_6] : memref<64x32xf32, #tpu.memory_space<vmem>>, vector<64x32xf32>
    %cst_7 = arith.constant dense<0.000000e+00> : vector<8x64xf32>
    %7 = tpu.matmul %5, %6, %cst_7 {dimension_numbers = #tpu.dot_dimension_numbers<[1], [1], [0], [0], [0, 0, 1, 0], [], []>} : vector<8x32xf32>, vector<64x32xf32>, vector<8x64xf32> -> vector<8x64xf32>
    %c0_8 = arith.constant 0 : index
    %c0_9 = arith.constant 0 : index
    %8 = vector.load %arg7[%c0_8, %c0_9] : memref<1x64xf32, #tpu.memory_space<vmem>>, vector<1x64xf32>
    %9 = vector.broadcast %8 : vector<1x64xf32> to vector<8x64xf32>
    %10 = arith.mulf %7, %9 : vector<8x64xf32>
    %11 = arith.addf %2, %10 : vector<8x64xf32>
    %c0_10 = arith.constant 0 : index
    %c0_11 = arith.constant 0 : index
    %12 = vector.load %arg8[%c0_10, %c0_11] : memref<1x64xf32, #tpu.memory_space<vmem>>, vector<1x64xf32>
    %13 = vector.broadcast %12 : vector<1x64xf32> to vector<8x64xf32>
    %14 = arith.addf %11, %13 : vector<8x64xf32>
    %c0_12 = arith.constant 0 : index
    %c0_13 = arith.constant 0 : index
    %15 = vector.load %arg9[%c0_12, %c0_13] : memref<8x64xf32, #tpu.memory_space<vmem>>, vector<8x64xf32>
    tpu.vector_store %arg9[%c0_12, %c0_13], %14 {strides = array<i32>} : memref<8x64xf32, #tpu.memory_space<vmem>>, vector<8x64xf32>,
    return
  }
  func.func @transform_0(%arg0: i32, %arg1: i32, %arg2: i32) -> (i32, i32) {
    %c0_i32 = arith.constant 0 : i32
    return %arg0, %arg2 : i32, i32
  }
  func.func @transform_1(%arg0: i32, %arg1: i32, %arg2: i32) -> (i32, i32) {
    %c0_i32 = arith.constant 0 : i32
    return %arg1, %arg2 : i32, i32
  }
  func.func @transform_2(%arg0: i32, %arg1: i32, %arg2: i32) -> (i32, i32) {
    %c0_i32 = arith.constant 0 : i32
    return %arg1, %arg2 : i32, i32
  }
  func.func @transform_3(%arg0: i32, %arg1: i32, %arg2: i32) -> (i32, i32) {
    %c0_i32 = arith.constant 0 : i32
    %c0_i32_0 = arith.constant 0 : i32
    return %c0_i32, %arg2 : i32, i32
  }
  func.func @transform_4(%arg0: i32, %arg1: i32, %arg2: i32) -> (i32, i32) {
    %c0_i32 = arith.constant 0 : i32
    %c0_i32_0 = arith.constant 0 : i32
    return %c0_i32, %arg1 : i32, i32
  }
  func.func @transform_5(%arg0: i32, %arg1: i32, %arg2: i32) -> (i32, i32) {
    %c0_i32 = arith.constant 0 : i32
    %c0_i32_0 = arith.constant 0 : i32
    return %c0_i32, %arg1 : i32, i32
  }
  func.func @transform_6(%arg0: i32, %arg1: i32, %arg2: i32) -> (i32, i32) {
    %c0_i32 = arith.constant 0 : i32
    return %arg0, %arg1 : i32, i32
  }
}

</mosaic_0001>

<llo_original>
// kernel: tpu_custom_call.1
$region0: #{tpu_custom_call.1}
  #allocation0 [shape = 'u32[]', space=smem, size = 0x4, offset = 0x4, fixed_abs, tag = 'smem constant byte address 0x4 - core index']
  #allocation1 [shape = 'u32[144,128]{1,0:T(1,128)}', space=vmem, size = 0x12000, scoped, tag = 'internal scratch']
  %s0 = inlined_call_operand.vmem [shape: f32[8,32], index: 0, kind: input, shape index: {}]
  %s1 = inlined_call_operand.vmem [shape: f32[64,32], index: 1, kind: input, shape index: {}]
  %s2 = inlined_call_operand.vmem [shape: f32[64,32], index: 2, kind: input, shape index: {}]
  %s3 = inlined_call_operand.vmem [shape: f32[1,32], index: 3, kind: input, shape index: {}]
  %s4 = inlined_call_operand.vmem [shape: f32[1,64], index: 4, kind: input, shape index: {}]
  %s5 = inlined_call_operand.vmem [shape: f32[1,64], index: 5, kind: input, shape index: {}]
  %s6 = inlined_call_operand.hbm [shape: f32[8,64], index: 6, kind: output, shape index: {}]
  %s7 = sld [smem:[#allocation0]]
  $region34: #{tpu_custom_call.1} parent=0
    _
  %s9 = ssub.s32 1, %s7
  %s10 = scalar_select 0, %s9, %s7
  $region1: #{tpu_custom_call.1} parent=0
    #allocation2 [shape = 'u8[4096]{0}', space=vmem, size = 0x1000, scoped, tag = 'output window, operand 0, single buffered']
    #allocation3 [shape = 's32[1]{0}', space=sflag, size = 0x4, scoped, tag = 'scoped memory for tpu_custom_call.1']
    %11 = vsyncpa [#allocation3], 0
    // Predicated region
    $region2: #{tpu_custom_call.1} parent=1 // pred_check
      _
    $region3: #{tpu_custom_call.1} parent=1 // pred_check_branch
      %13 = sbr.rel (0) target = $region5
    $region4: #{tpu_custom_call.1} parent=1 // pred_region
      _
    $region5: #{tpu_custom_call.1} parent=1 // pred_fallthru
      _
    // Predicated region
    $region6: #{tpu_custom_call.1} parent=1 // pred_check
      _
    $region7: #{tpu_custom_call.1} parent=1 // pred_check_branch
      %15 = sbr.rel (0) target = $region9
    $region8: #{tpu_custom_call.1} parent=1 // pred_region
      _
    $region9: #{tpu_custom_call.1} parent=1 // pred_fallthru
      _
    // Predicated region
    $region10: #{tpu_custom_call.1} parent=1 // pred_check
      _
    $region11: #{tpu_custom_call.1} parent=1 // pred_check_branch
      %17 = sbr.rel (0) target = $region13
    $region12: #{tpu_custom_call.1} parent=1 // pred_region
      _
    $region13: #{tpu_custom_call.1} parent=1 // pred_fallthru
      _
    // Predicated region
    $region14: #{tpu_custom_call.1} parent=1 // pred_check
      _
    $region15: #{tpu_custom_call.1} parent=1 // pred_check_branch
      %19 = sbr.rel (0) target = $region17
    $region16: #{tpu_custom_call.1} parent=1 // pred_region
      _
    $region17: #{tpu_custom_call.1} parent=1 // pred_fallthru
      _
    // Predicated region
    $region18: #{tpu_custom_call.1} parent=1 // pred_check
      _
    $region19: #{tpu_custom_call.1} parent=1 // pred_check_branch
      %21 = sbr.rel (0) target = $region21
    $region20: #{tpu_custom_call.1} parent=1 // pred_region
      _
    $region21: #{tpu_custom_call.1} parent=1 // pred_fallthru
      _
    // Predicated region
    $region22: #{tpu_custom_call.1} parent=1 // pred_check
      _
    $region23: #{tpu_custom_call.1} parent=1 // pred_check_branch
      %23 = sbr.rel (0) target = $region25
    $region24: #{tpu_custom_call.1} parent=1 // pred_region
      _
    $region25: #{tpu_custom_call.1} parent=1 // pred_fallthru
      _
    %v24 = vld [vmem:[%s0] sm:$0xff]
    %v25 = vld [vmem:[%s1] sm:$0xff]
    %v26 = vld [vmem:[%s1 + $0x8] sm:$0xff]
    %v27 = vld [vmem:[%s1 + $0x10] sm:$0xff]
    %v28 = vld [vmem:[%s1 + $0x18] sm:$0xff]
    %v29 = vld [vmem:[%s1 + $0x20] sm:$0xff]
    %v30 = vld [vmem:[%s1 + $0x28] sm:$0xff]
    %v31 = vld [vmem:[%s1 + $0x30] sm:$0xff]
    %v32 = vld [vmem:[%s1 + $0x38] sm:$0xff]
    %v33 = vld [vmem:[%s3] sm:$0x1]
    %v35 = vlaneseq
    %v36 = vshrl.u32 %v35, 7
    %v37 = vsub.s32 0, %v36
    %v38 = vrot.slane %v33, %v37
    %v40 = vmul.f32 %v24, %v38
    %v41 = vld [vmem:[%s2] sm:$0xff]
    %v42 = vld [vmem:[%s2 + $0x8] sm:$0xff]
    %v43 = vld [vmem:[%s2 + $0x10] sm:$0xff]
    %v44 = vld [vmem:[%s2 + $0x18] sm:$0xff]
    %v45 = vld [vmem:[%s2 + $0x20] sm:$0xff]
    %v46 = vld [vmem:[%s2 + $0x28] sm:$0xff]
    %v47 = vld [vmem:[%s2 + $0x30] sm:$0xff]
    %v48 = vld [vmem:[%s2 + $0x38] sm:$0xff]
    %vm49 = vcmask 261120
    %v51 = vsel %vm49, %v40, 0
    %v54 = vsel %vm49, %v41, 0
    %v57 = vsel %vm49, %v42, 0
    %v60 = vsel %vm49, %v43, 0
    %v63 = vsel %vm49, %v44, 0
    %v66 = vsel %vm49, %v45, 0
    %v69 = vsel %vm49, %v46, 0
    %v72 = vsel %vm49, %v47, 0
    %v75 = vsel %vm49, %v48, 0
    %77 = vmatprep.subr.mxu0 0.0
    %78 = vmatpush1.xpose.msra.mxu0 0.0
    %79 = vmatprep.subr.mxu0 0.0
    %80 = vmatpush1.xpose.msra.mxu0 0.0
    %81 = vmatprep.subr.mxu0 0.0
    %82 = vmatpush1.xpose.msra.mxu0 0.0
    %83 = vmatprep.subr.mxu0 0.0
    %84 = vmatpush1.xpose.msra.mxu0 0.0
    %85 = vmatprep.subr.mxu0 0.0
    %86 = vmatpush1.xpose.msra.mxu0 0.0
    %87 = vmatprep.subr.mxu0 0.0
    %88 = vmatpush1.xpose.msra.mxu0 0.0
    %89 = vmatprep.subr.mxu0 0.0
    %90 = vmatpush1.xpose.msra.mxu0 0.0
    %91 = vmatprep.subr.mxu0 0.0
    %92 = vmatpush1.xpose.msra.mxu0 0.0
    %93 = vmatprep.subr.mxu0 0.0
    %94 = vmatpush1.xpose.msra.mxu0 %v75
    %95 = vmatprep.subr.mxu0 0.0
    %96 = vmatpush1.xpose.msra.mxu0 %v72
    %97 = vmatprep.subr.mxu0 0.0
    %98 = vmatpush1.xpose.msra.mxu0 %v69
    %99 = vmatprep.subr.mxu0 0.0
    %100 = vmatpush1.xpose.msra.mxu0 %v66
    %101 = vmatprep.subr.mxu0 0.0
    %102 = vmatpush1.xpose.msra.mxu0 %v63
    %103 = vmatprep.subr.mxu0 0.0
    %104 = vmatpush1.xpose.msra.mxu0 %v60
    %105 = vmatprep.subr.mxu0 0.0
    %106 = vmatpush1.xpose.msra.mxu0 %v57
    %107 = vmatprep.subr.mxu0 0.0
    %108 = vmatpush1.xpose.msra.mxu0 %v54
    %109 = vmatprep.subr.mxu0 0.0
    %110 = vmatpush2.xpose.msra.mxu0 0.0
    %111 = vmatprep.subr.mxu0 0.0
    %112 = vmatpush2.xpose.msra.mxu0 0.0
    %113 = vmatprep.subr.mxu0 0.0
    %114 = vmatpush2.xpose.msra.mxu0 0.0
    %115 = vmatprep.subr.mxu0 0.0
    %116 = vmatpush2.xpose.msra.mxu0 0.0
    %117 = vmatprep.subr.mxu0 0.0
    %118 = vmatpush2.xpose.msra.mxu0 0.0
    %119 = vmatprep.subr.mxu0 0.0
    %120 = vmatpush2.xpose.msra.mxu0 0.0
    %121 = vmatprep.subr.mxu0 0.0
    %122 = vmatpush2.xpose.msra.mxu0 0.0
    %123 = vmatprep.subr.mxu0 0.0
    %124 = vmatpush2.xpose.msra.mxu0 0.0
    %125 = vmatprep.subr.mxu0 0.0
    %126 = vmatpush2.xpose.msra.mxu0 0.0
    %127 = vmatprep.subr.mxu0 0.0
    %128 = vmatpush2.xpose.msra.mxu0 0.0
    %129 = vmatprep.subr.mxu0 0.0
    %130 = vmatpush2.xpose.msra.mxu0 0.0
    %131 = vmatprep.subr.mxu0 0.0
    %132 = vmatpush2.xpose.msra.mxu0 0.0
    %133 = vmatprep.subr.mxu0 0.0
    %134 = vmatpush2.xpose.msra.mxu0 0.0
    %135 = vmatprep.subr.mxu0 0.0
    %136 = vmatpush2.xpose.msra.mxu0 0.0
    %137 = vmatprep.subr.mxu0 0.0
    %138 = vmatpush2.xpose.msra.mxu0 0.0
    %139 = vmatprep.subr.mxu0 0.0
    %140 = vmatpush2.xpose.msra.mxu0 0.0
    %141 = vmatprep.mubr.f32.mxu0 0.0
    %142 = vmatmul.mubr.f32.gmra.mxu0 %v51
    %v143 = vpop.f32.mrf.mxu0
    %v144 = vadd.f32 0.0, %v143
    %v145 = vpop.f32.mrf.mxu0
    %146 = vdwg.mxu0
    %v147 = vld [vmem:[%s4] sm:$0x1]
    %v149 = vlaneseq
    %v150 = vshrl.u32 %v149, 7
    %v151 = vsub.s32 0, %v150
    %v152 = vrot.slane %v147, %v151
    %v154 = vmul.f32 %v144, %v152
    %v156 = vsel %vm49, %v24, 0
    %v159 = vsel %vm49, %v25, 0
    %v162 = vsel %vm49, %v26, 0
    %v165 = vsel %vm49, %v27, 0
    %v168 = vsel %vm49, %v28, 0
    %v171 = vsel %vm49, %v29, 0
    %v174 = vsel %vm49, %v30, 0
    %v177 = vsel %vm49, %v31, 0
    %v180 = vsel %vm49, %v32, 0
    %182 = vmatprep.subr.mxu0 0.0
    %183 = vmatpush1.xpose.msra.mxu0 0.0
    %184 = vmatprep.subr.mxu0 0.0
    %185 = vmatpush1.xpose.msra.mxu0 0.0
    %186 = vmatprep.subr.mxu0 0.0
    %187 = vmatpush1.xpose.msra.mxu0 0.0
    %188 = vmatprep.subr.mxu0 0.0
    %189 = vmatpush1.xpose.msra.mxu0 0.0
    %190 = vmatprep.subr.mxu0 0.0
    %191 = vmatpush1.xpose.msra.mxu0 0.0
    %192 = vmatprep.subr.mxu0 0.0
    %193 = vmatpush1.xpose.msra.mxu0 0.0
    %194 = vmatprep.subr.mxu0 0.0
    %195 = vmatpush1.xpose.msra.mxu0 0.0
    %196 = vmatprep.subr.mxu0 0.0
    %197 = vmatpush1.xpose.msra.mxu0 0.0
    %198 = vmatprep.subr.mxu0 0.0
    %199 = vmatpush1.xpose.msra.mxu0 %v180
    %200 = vmatprep.subr.mxu0 0.0
    %201 = vmatpush1.xpose.msra.mxu0 %v177
    %202 = vmatprep.subr.mxu0 0.0
    %203 = vmatpush1.xpose.msra.mxu0 %v174
    %204 = vmatprep.subr.mxu0 0.0
    %205 = vmatpush1.xpose.msra.mxu0 %v171
    %206 = vmatprep.subr.mxu0 0.0
    %207 = vmatpush1.xpose.msra.mxu0 %v168
    %208 = vmatprep.subr.mxu0 0.0
    %209 = vmatpush1.xpose.msra.mxu0 %v165
    %210 = vmatprep.subr.mxu0 0.0
    %211 = vmatpush1.xpose.msra.mxu0 %v162
    %212 = vmatprep.subr.mxu0 0.0
    %213 = vmatpush1.xpose.msra.mxu0 %v159
    %214 = vmatprep.subr.mxu0 0.0
    %215 = vmatpush2.xpose.msra.mxu0 0.0
    %216 = vmatprep.subr.mxu0 0.0
    %217 = vmatpush2.xpose.msra.mxu0 0.0
    %218 = vmatprep.subr.mxu0 0.0
    %219 = vmatpush2.xpose.msra.mxu0 0.0
    %220 = vmatprep.subr.mxu0 0.0
    %221 = vmatpush2.xpose.msra.mxu0 0.0
    %222 = vmatprep.subr.mxu0 0.0
    %223 = vmatpush2.xpose.msra.mxu0 0.0
    %224 = vmatprep.subr.mxu0 0.0
    %225 = vmatpush2.xpose.msra.mxu0 0.0
    %226 = vmatprep.subr.mxu0 0.0
    %227 = vmatpush2.xpose.msra.mxu0 0.0
    %228 = vmatprep.subr.mxu0 0.0
    %229 = vmatpush2.xpose.msra.mxu0 0.0
    %230 = vmatprep.subr.mxu0 0.0
    %231 = vmatpush2.xpose.msra.mxu0 0.0
    %232 = vmatprep.subr.mxu0 0.0
    %233 = vmatpush2.xpose.msra.mxu0 0.0
    %234 = vmatprep.subr.mxu0 0.0
    %235 = vmatpush2.xpose.msra.mxu0 0.0
    %236 = vmatprep.subr.mxu0 0.0
    %237 = vmatpush2.xpose.msra.mxu0 0.0
    %238 = vmatprep.subr.mxu0 0.0
    %239 = vmatpush2.xpose.msra.mxu0 0.0
    %240 = vmatprep.subr.mxu0 0.0
    %241 = vmatpush2.xpose.msra.mxu0 0.0
    %242 = vmatprep.subr.mxu0 0.0
    %243 = vmatpush2.xpose.msra.mxu0 0.0
    %244 = vmatprep.subr.mxu0 0.0
    %245 = vmatpush2.xpose.msra.mxu0 0.0
    %246 = vmatprep.mubr.f32.mxu0 0.0
    %247 = vmatmul.mubr.f32.gmra.mxu0 %v156
    %v248 = vpop.f32.mrf.mxu0
    %v249 = vadd.f32 %v154, %v248
    %v250 = vpop.f32.mrf.mxu0
    %251 = vdwg.mxu0
    %v252 = vld [vmem:[%s5] sm:$0x1]
    %v254 = vlaneseq
    %v255 = vshrl.u32 %v254, 7
    %v256 = vsub.s32 0, %v255
    %v257 = vrot.slane %v252, %v256
    %v259 = vadd.f32 %v249, %v257
    %vm260 = vcmask 523264
    %261 = vst.msk [vmem:[#allocation2] sm:$0xff] %vm260, %v259
    // Predicated region
    $region26: #{tpu_custom_call.1} parent=1 // pred_check
      _
    $region27: #{tpu_custom_call.1} parent=1 // pred_check_branch
      %263 = sbr.rel (0) target = $region29
    $region28: #{tpu_custom_call.1} parent=1 // pred_region
      %s265 = ssub.s32 128, 128
      %266 = vsyncadd [#allocation3], %s265
      %s268 = sshll.u32 [#allocation2], 4
      %s269 = int_to_ptr.vmem [resolvable:$true] %s268
      %271 = dma.vmem_to_hbm [thread:$0]  %s269, 128, %s6, [#allocation3]
    $region29: #{tpu_custom_call.1} parent=1 // pred_fallthru
      _
    // Predicated region
    $region30: #{tpu_custom_call.1} parent=1 // pred_check
      _
    $region31: #{tpu_custom_call.1} parent=1 // pred_check_branch
      %273 = sbr.rel (0) target = $region33
    $region32: #{tpu_custom_call.1} parent=1 // pred_region
      %274 = dma.done [#allocation3], 128
    $region33: #{tpu_custom_call.1} parent=1 // pred_fallthru
      _
    %275 = vsyncpa [#allocation3], 1

</llo_original>
